<compile_context>
chip_gen: v5e
topology: v5e:2x2
jax: 0.10.0
libtpu: 0.0.40
codegen_flags: <defaults>
</compile_context>

<pallas_src>
import functools

import jax
import jax.numpy as jnp
from jax import lax
from jax.experimental import pallas as pl
from jax.experimental.pallas import tpu as pltpu


MAX_BB = 256   # fills the 256-row MXU on v6e/v7x; v5e saturates at 128 already
LANE = 128


def _round_up(n, m):
    return ((n + m - 1) // m) * m


# New column layout: 3 sigmoid gates contiguous, tanh (g) gate last; each gate block is
# [forward H cols | backward H cols].
_GATE_ORDER = ("i", "f", "o", "g")
_PT_GATE_IDX = {"i": 0, "f": 1, "g": 2, "o": 3}   # PyTorch LSTM gate order [i, f, g, o]


def _mix_cols(f_mat, b_mat, H):
    """f_mat / b_mat: (..., 4H) in PyTorch gate order [i,f,g,o].
    Returns (..., 8H) ordered [i_f i_b | f_f f_b | o_f o_b | g_f g_b]."""
    parts = []
    for gname in _GATE_ORDER:
        k = _PT_GATE_IDX[gname]
        parts.append(f_mat[..., k * H:(k + 1) * H])
        parts.append(b_mat[..., k * H:(k + 1) * H])
    return jnp.concatenate(parts, axis=-1)


def prepare_params(params):
    """One-time parameter fusion (do this at load time, not per forward call)."""
    H = params["w_hh_f"].shape[1]
    Din = params["w_proj"].shape[1]

    wp_t = params["w_proj"].T.astype(jnp.float32)          # (Din, H) Conv1d k=1, no bias

    # Fold the projection into the input-gate weights (dropout == identity in eval mode).
    w_in_f = wp_t @ params["w_ih_f"].T                     # (Din, 4H)
    w_in_b = wp_t @ params["w_ih_b"].T                     # (Din, 4H)
    w_big = _mix_cols(w_in_f, w_in_b, H)                   # (Din, 8H), dense (no zero blocks)

    # Block-diagonal recurrent weights for the fused carry h_cat = [h_f | h_b].
    whhf_t = params["w_hh_f"].T                            # (H, 4H)
    whhb_t = params["w_hh_b"].T
    z = jnp.zeros_like(whhf_t)
    w_hh_big = jnp.concatenate(
        [_mix_cols(whhf_t, z, H), _mix_cols(z, whhb_t, H)], axis=0)    # (2H, 8H)

    bf = (params["b_ih_f"] + params["b_hh_f"]).reshape(1, 4 * H)
    bb = (params["b_ih_b"] + params["b_hh_b"]).reshape(1, 4 * H)
    b_all = _mix_cols(bf, bb, H)                            # (1, 8H), stays f32

    return {"w_big": w_big.astype(jnp.bfloat16),            # bf16 MXU operands
            "w_hh_big": w_hh_big.astype(jnp.bfloat16),
            "b_all": b_all.astype(jnp.float32),
            "hidden": H, "in_size": Din}


def _avsubnet_kernel(x_ref, wbig_ref, whh_ref, b_ref, out_ref, gin_ref,
                     *, T, BB, H, out_cols):
    H8 = 8 * H

    # One lane-dense bf16 matmul for ALL input-gate contributions of both directions;
    # result (T*BB, 8H) lands in a VMEM scratch so the loop only keeps (BB, ...) rows live.
    gin_ref[...] = (jnp.dot(x_ref[...], wbig_ref[...],
                            preferred_element_type=jnp.float32) + b_ref[...])

    whh = whh_ref[...]                                      # (2H, 8H) bf16, block-diag/gate
    # Forward-lane mask over the 8H columns (each 2H gate block is [fwd H | bwd H]).
    fwd_mask = jnp.broadcast_to(
        (lax.broadcasted_iota(jnp.int32, (1, H8), 1) % (2 * H)) < H, (BB, H8))

    # TODO(synk): nn.Dropout implemented as identity (eval mode).
    def step(t, carry):
        h, c = carry                                        # (BB, 2H) f32 carries
        rf = pl.multiple_of(t * BB, BB)
        rb = pl.multiple_of((T - 1 - t) * BB, BB)
        # Forward lanes read gin at time t, backward lanes at time T-1-t.
        gi = jnp.where(fwd_mask,
                       gin_ref[pl.ds(rf, BB), :],
                       gin_ref[pl.ds(rb, BB), :])
        g = gi + jnp.dot(h.astype(jnp.bfloat16), whh,
                         preferred_element_type=jnp.float32)            # (BB, 8H) f32
        s = jax.nn.sigmoid(g[:, :6 * H])                    # [i_f i_b | f_f f_b | o_f o_b]
        gg = jnp.tanh(g[:, 6 * H:])                         # [g_f g_b]
        i_g = s[:, :2 * H]
        f_g = s[:, 2 * H:4 * H]
        o_g = s[:, 4 * H:6 * H]
        c = f_g * c + i_g * gg
        h = o_g * jnp.tanh(c)
        return h, c

    h0 = jnp.zeros((BB, 2 * H), jnp.float32)
    c0 = jnp.zeros((BB, 2 * H), jnp.float32)
    h, _ = lax.fori_loop(0, T, step, (h0, c0),
                         unroll=True if T <= 16 else 4)

    # h == concat([final_h_forward, final_h_backward], -1); pad for a lane-dense store.
    if out_cols > 2 * H:
        h = jnp.concatenate(
            [h, jnp.zeros((BB, out_cols - 2 * H), h.dtype)], axis=-1)
    out_ref[...] = h


def avsubnet_forward(x, prepped):
    """x: (B, T, in_size) float32 -> (B, 2*hidden) float32."""
    B, T, Din = x.shape
    H = prepped["hidden"]
    BB = min(MAX_BB, _round_up(B, 8))
    nb = pl.cdiv(B, BB)
    Bp = nb * BB
    out_cols = _round_up(2 * H, LANE)

    # Pad batch, then lay rows out block-major / time-major: row (i, t*BB + b) = x[i*BB+b, t].
    xp = jnp.pad(x, ((0, Bp - B), (0, 0), (0, 0)))
    x_cat = (xp.reshape(nb, BB, T, Din)
               .transpose(0, 2, 1, 3)
               .reshape(nb * T * BB, Din)
               .astype(jnp.bfloat16))                       # bf16 halves x HBM traffic

    w_big = prepped["w_big"]
    w_hh_big = prepped["w_hh_big"]
    b_all = prepped["b_all"]

    kernel = functools.partial(_avsubnet_kernel, T=T, BB=BB, H=H, out_cols=out_cols)

    # Conservative VMEM estimate; only raise the scoped limit when needed (cap 64 MiB, v7x).
    est = (2 * T * BB * Din * 2                # double-buffered bf16 x block
           + T * BB * 8 * H * 4                # gin scratch (f32)
           + (Din + 2 * H) * 8 * H * 2 + 8 * H * 4          # weights + bias
           + 2 * BB * out_cols * 4)            # output block
    vmem_limit = min(2 * est, 64 * 1024 * 1024) if est > 24 * 1024 * 1024 else None

    # TODO(synk): on v7x with nb >= 2, consider pltpu.CORE_PARALLEL if the profile shows one
    # TensorCore idle; "parallel" is the portable default.
    out = pl.pallas_call(
        kernel,
        grid=(nb,),
        in_specs=[
            pl.BlockSpec((T * BB, Din), lambda i: (i, 0)),
            pl.BlockSpec(w_big.shape, lambda i: (0, 0)),       # weights stay VMEM-resident
            pl.BlockSpec(w_hh_big.shape, lambda i: (0, 0)),
            pl.BlockSpec(b_all.shape, lambda i: (0, 0)),
        ],
        out_specs=pl.BlockSpec((BB, out_cols), lambda i: (i, 0)),
        out_shape=jax.ShapeDtypeStruct((nb * BB, out_cols), jnp.float32),
        scratch_shapes=[pltpu.VMEM((T * BB, 8 * H), jnp.float32)],
        compiler_params=pltpu.CompilerParams(
            dimension_semantics=("parallel",),
            vmem_limit_bytes=vmem_limit),
    )(x_cat, w_big, w_hh_big, b_all)

    return out[:B, :2 * H]   # drop batch padding and lane padding


def avsubnet_ref(x, params):
    """Pure-JAX reference mirroring the PyTorch forward (eval mode)."""
    B, T, _ = x.shape
    H = params["w_hh_f"].shape[1]
    xp = jnp.einsum("btd,hd->bth", x, params["w_proj"])  # Conv1d k=1, no bias

    def cell(w_ih, w_hh, b_ih, b_hh, reverse):
        h = jnp.zeros((B, H), jnp.float32)
        c = jnp.zeros((B, H), jnp.float32)
        ts = range(T - 1, -1, -1) if reverse else range(T)
        for t in ts:
            g = xp[:, t, :] @ w_ih.T + h @ w_hh.T + b_ih + b_hh
            i = jax.nn.sigmoid(g[:, :H])
            f = jax.nn.sigmoid(g[:, H:2 * H])
            gg = jnp.tanh(g[:, 2 * H:3 * H])
            o = jax.nn.sigmoid(g[:, 3 * H:])
            c = f * c + i * gg
            h = o * jnp.tanh(c)
        return h

    h_f = cell(params["w_ih_f"], params["w_hh_f"], params["b_ih_f"], params["b_hh_f"], False)
    h_b = cell(params["w_ih_b"], params["w_hh_b"], params["b_ih_b"], params["b_hh_b"], True)
    return jnp.concatenate([h_f, h_b], axis=-1)


def init_params(key, in_size, hidden):
    ks = jax.random.split(key, 9)
    s = 0.1
    return {
        "w_proj": s * jax.random.normal(ks[0], (hidden, in_size), jnp.float32),
        "w_ih_f": s * jax.random.normal(ks[1], (4 * hidden, hidden), jnp.float32),
        "w_hh_f": s * jax.random.normal(ks[2], (4 * hidden, hidden), jnp.float32),
        "b_ih_f": s * jax.random.normal(ks[3], (4 * hidden,), jnp.float32),
        "b_hh_f": s * jax.random.normal(ks[4], (4 * hidden,), jnp.float32),
        "w_ih_b": s * jax.random.normal(ks[5], (4 * hidden, hidden), jnp.float32),
        "w_hh_b": s * jax.random.normal(ks[6], (4 * hidden, hidden), jnp.float32),
        "b_ih_b": s * jax.random.normal(ks[7], (4 * hidden,), jnp.float32),
        "b_hh_b": s * jax.random.normal(ks[8], (4 * hidden,), jnp.float32),
    }


if __name__ == "__main__":
    B, T, IN_SIZE, HIDDEN = 2, 8, 16, 32

    key = jax.random.PRNGKey(0)
    k_x, k_p = jax.random.split(key)
    x = jax.random.normal(k_x, (B, T, IN_SIZE), jnp.float32)
    params = init_params(k_p, IN_SIZE, HIDDEN)

    prepped = prepare_params(params)   # one-time weight fusion (param-load time)

    out = avsubnet_forward(x, prepped)
    out = jax.block_until_ready(out)

    ref = avsubnet_ref(x, params)
    assert out.shape == (B, 2 * HIDDEN)
    assert jnp.allclose(out, ref, rtol=1e-2, atol=1e-2), "mismatch vs pure-JAX reference"

    print("KERNEL_OK")
</pallas_src>

<mosaic_0001>
module attributes {stable_mosaic.version = 11 : i64} {
  func.func @_avsubnet_kernel(%arg0: i32, %arg1: memref<64x16xbf16, #tpu.memory_space<vmem>>, %arg2: memref<16x256xbf16, #tpu.memory_space<vmem>>, %arg3: memref<64x256xbf16, #tpu.memory_space<vmem>>, %arg4: memref<1x256xf32, #tpu.memory_space<vmem>>, %arg5: memref<8x128xf32, #tpu.memory_space<vmem>>, %arg6: memref<64x256xf32, #tpu.memory_space<vmem>>) attributes {dimension_semantics = [#tpu.dimension_semantics<parallel>], iteration_bounds = array<i64: 1>, scalar_prefetch = 0 : i64, scratch_operands = 1 : i64, tpu.core_type = #tpu.core_type<tc>, window_params = [{transform_indices = @transform_0, window_bounds = array<i64: 64, 16>}, {pipeline_mode = #tpu.pipeline_mode<synchronous>, transform_indices = @transform_1, window_bounds = array<i64: 16, 256>}, {pipeline_mode = #tpu.pipeline_mode<synchronous>, transform_indices = @transform_2, window_bounds = array<i64: 64, 256>}, {pipeline_mode = #tpu.pipeline_mode<synchronous>, transform_indices = @transform_3, window_bounds = array<i64: 1, 256>}, {transform_indices = @transform_4, window_bounds = array<i64: 8, 128>}]} {
    %c0 = arith.constant 0 : index
    %c0_0 = arith.constant 0 : index
    %0 = vector.load %arg1[%c0, %c0_0] : memref<64x16xbf16, #tpu.memory_space<vmem>>, vector<64x16xbf16>
    %c0_1 = arith.constant 0 : index
    %c0_2 = arith.constant 0 : index
    %1 = vector.load %arg2[%c0_1, %c0_2] : memref<16x256xbf16, #tpu.memory_space<vmem>>, vector<16x256xbf16>
    %cst = arith.constant dense<0.000000e+00> : vector<64x256xf32>
    %2 = tpu.matmul %0, %1, %cst {dimension_numbers = #tpu.dot_dimension_numbers<[1], [0], [0], [1], [0, 0, 1, 1], [], []>} : vector<64x16xbf16>, vector<16x256xbf16>, vector<64x256xf32> -> vector<64x256xf32>
    %c0_3 = arith.constant 0 : index
    %c0_4 = arith.constant 0 : index
    %3 = vector.load %arg4[%c0_3, %c0_4] : memref<1x256xf32, #tpu.memory_space<vmem>>, vector<1x256xf32>
    %4 = vector.broadcast %3 : vector<1x256xf32> to vector<64x256xf32>
    %5 = arith.addf %2, %4 : vector<64x256xf32>
    %c0_5 = arith.constant 0 : index
    %c0_6 = arith.constant 0 : index
    %6 = vector.load %arg6[%c0_5, %c0_6] : memref<64x256xf32, #tpu.memory_space<vmem>>, vector<64x256xf32>
    tpu.vector_store %arg6[%c0_5, %c0_6], %5 {strides = array<i32>} : memref<64x256xf32, #tpu.memory_space<vmem>>, vector<64x256xf32>,
    %c0_7 = arith.constant 0 : index
    %c0_8 = arith.constant 0 : index
    %7 = vector.load %arg3[%c0_7, %c0_8] : memref<64x256xbf16, #tpu.memory_space<vmem>>, vector<64x256xbf16>
    %8 = tpu.iota {dimensions = array<i32: 1>} : vector<1x256xi32>
    %c64_i32 = arith.constant 64 : i32
    %c0_i32 = arith.constant 0 : i32
    %9 = arith.cmpi eq, %c64_i32, %c0_i32 : i32
    %c1_i32 = arith.constant 1 : i32
    %10 = arith.select %9, %c1_i32, %c64_i32 : i32
    %11 = vector.broadcast %10 : i32 to vector<1x256xi32>
    %12 = arith.remsi %8, %11 : vector<1x256xi32>
    %c0_i32_9 = arith.constant 0 : i32
    %13 = vector.broadcast %c0_i32_9 : i32 to vector<1x256xi32>
    %14 = arith.cmpi ne, %12, %13 : vector<1x256xi32>
    %c0_i32_10 = arith.constant 0 : i32
    %15 = vector.broadcast %c0_i32_10 : i32 to vector<1x256xi32>
    %16 = arith.cmpi slt, %12, %15 : vector<1x256xi32>
    %c0_i32_11 = arith.constant 0 : i32
    %17 = arith.cmpi slt, %10, %c0_i32_11 : i32
    %18 = vector.broadcast %17 : i1 to vector<1x256xi1>
    %19 = vector.broadcast %18 : vector<1x256xi1> to vector<1x256xi1>
    %20 = arith.xori %16, %19 : vector<1x256xi1>
    %21 = arith.andi %20, %14 : vector<1x256xi1>
    %22 = vector.broadcast %10 : i32 to vector<1x256xi32>
    %23 = arith.addi %12, %22 : vector<1x256xi32>
    %24 = arith.select %21, %23, %12 : vector<1x256xi1>, vector<1x256xi32>
    %c32_i32 = arith.constant 32 : i32
    %25 = vector.broadcast %c32_i32 : i32 to vector<1x256xi32>
    %26 = arith.cmpi slt, %24, %25 : vector<1x256xi32>
    %27 = vector.shape_cast %26 : vector<1x256xi1> to vector<1x256xi1>
    %28 = vector.broadcast %27 : vector<1x256xi1> to vector<8x256xi1>
    %cst_12 = arith.constant 0.000000e+00 : f32
    %29 = vector.broadcast %cst_12 : f32 to vector<8x64xf32>
    %cst_13 = arith.constant 0.000000e+00 : f32
    %30 = vector.broadcast %cst_13 : f32 to vector<8x64xf32>
    %c0_i32_14 = arith.constant 0 : i32
    %c8_i32 = arith.constant 8 : i32
    %31 = arith.muli %c0_i32_14, %c8_i32 : i32
    %32 = tpu.assume_multiple %31, 8 : i32
    %c7_i32 = arith.constant 7 : i32
    %33 = arith.subi %c7_i32, %c0_i32_14 : i32
    %c8_i32_15 = arith.constant 8 : i32
    %34 = arith.muli %33, %c8_i32_15 : i32
    %35 = tpu.assume_multiple %34, 8 : i32
    %36 = arith.index_cast %32 : i32 to index
    %c0_16 = arith.constant 0 : index
    %37 = vector.load %arg6[%36, %c0_16] : memref<64x256xf32, #tpu.memory_space<vmem>>, vector<8x256xf32>
    %38 = arith.index_cast %35 : i32 to index
    %c0_17 = arith.constant 0 : index
    %39 = vector.load %arg6[%38, %c0_17] : memref<64x256xf32, #tpu.memory_space<vmem>>, vector<8x256xf32>
    %40 = arith.select %28, %37, %39 : vector<8x256xi1>, vector<8x256xf32>
    %41 = arith.truncf %29 : vector<8x64xf32> to vector<8x64xbf16>
    %cst_18 = arith.constant dense<0.000000e+00> : vector<8x256xf32>
    %42 = tpu.matmul %41, %7, %cst_18 {dimension_numbers = #tpu.dot_dimension_numbers<[1], [0], [0], [1], [0, 0, 1, 1], [], []>} : vector<8x64xbf16>, vector<64x256xbf16>, vector<8x256xf32> -> vector<8x256xf32>
    %43 = arith.addf %40, %42 : vector<8x256xf32>
    %44 = vector.extract_strided_slice %43 {offsets = [0, 0], sizes = [8, 192], strides = [1, 1]} : vector<8x256xf32> to vector<8x192xf32>
    %45 = arith.negf %44 : vector<8x192xf32>
    %46 = math.exp %45 : vector<8x192xf32>
    %cst_19 = arith.constant 1.000000e+00 : f32
    %47 = vector.broadcast %cst_19 : f32 to vector<8x192xf32>
    %48 = arith.addf %47, %46 : vector<8x192xf32>
    %49 = arith.divf %47, %48 : vector<8x192xf32>
    %50 = vector.extract_strided_slice %43 {offsets = [0, 192], sizes = [8, 64], strides = [1, 1]} : vector<8x256xf32> to vector<8x64xf32>
    %51 = math.tanh %50 : vector<8x64xf32>
    %52 = vector.extract_strided_slice %49 {offsets = [0, 0], sizes = [8, 64], strides = [1, 1]} : vector<8x192xf32> to vector<8x64xf32>
    %53 = vector.extract_strided_slice %49 {offsets = [0, 64], sizes = [8, 64], strides = [1, 1]} : vector<8x192xf32> to vector<8x64xf32>
    %54 = vector.extract_strided_slice %49 {offsets = [0, 128], sizes = [8, 64], strides = [1, 1]} : vector<8x192xf32> to vector<8x64xf32>
    %55 = arith.mulf %53, %30 : vector<8x64xf32>
    %56 = arith.mulf %52, %51 : vector<8x64xf32>
    %57 = arith.addf %55, %56 : vector<8x64xf32>
    %58 = math.tanh %57 : vector<8x64xf32>
    %59 = arith.mulf %54, %58 : vector<8x64xf32>
    %c1_i32_20 = arith.constant 1 : i32
    %c8_i32_21 = arith.constant 8 : i32
    %60 = arith.muli %c1_i32_20, %c8_i32_21 : i32
    %61 = tpu.assume_multiple %60, 8 : i32
    %c7_i32_22 = arith.constant 7 : i32
    %62 = arith.subi %c7_i32_22, %c1_i32_20 : i32
    %c8_i32_23 = arith.constant 8 : i32
    %63 = arith.muli %62, %c8_i32_23 : i32
    %64 = tpu.assume_multiple %63, 8 : i32
    %65 = arith.index_cast %61 : i32 to index
    %c0_24 = arith.constant 0 : index
    %66 = vector.load %arg6[%65, %c0_24] : memref<64x256xf32, #tpu.memory_space<vmem>>, vector<8x256xf32>
    %67 = arith.index_cast %64 : i32 to index
    %c0_25 = arith.constant 0 : index
    %68 = vector.load %arg6[%67, %c0_25] : memref<64x256xf32, #tpu.memory_space<vmem>>, vector<8x256xf32>
    %69 = arith.select %28, %66, %68 : vector<8x256xi1>, vector<8x256xf32>
    %70 = arith.truncf %59 : vector<8x64xf32> to vector<8x64xbf16>
    %cst_26 = arith.constant dense<0.000000e+00> : vector<8x256xf32>
    %71 = tpu.matmul %70, %7, %cst_26 {dimension_numbers = #tpu.dot_dimension_numbers<[1], [0], [0], [1], [0, 0, 1, 1], [], []>} : vector<8x64xbf16>, vector<64x256xbf16>, vector<8x256xf32> -> vector<8x256xf32>
    %72 = arith.addf %69, %71 : vector<8x256xf32>
    %73 = vector.extract_strided_slice %72 {offsets = [0, 0], sizes = [8, 192], strides = [1, 1]} : vector<8x256xf32> to vector<8x192xf32>
    %74 = arith.negf %73 : vector<8x192xf32>
    %75 = math.exp %74 : vector<8x192xf32>
    %cst_27 = arith.constant 1.000000e+00 : f32
    %76 = vector.broadcast %cst_27 : f32 to vector<8x192xf32>
    %77 = arith.addf %76, %75 : vector<8x192xf32>
    %78 = arith.divf %76, %77 : vector<8x192xf32>
    %79 = vector.extract_strided_slice %72 {offsets = [0, 192], sizes = [8, 64], strides = [1, 1]} : vector<8x256xf32> to vector<8x64xf32>
    %80 = math.tanh %79 : vector<8x64xf32>
    %81 = vector.extract_strided_slice %78 {offsets = [0, 0], sizes = [8, 64], strides = [1, 1]} : vector<8x192xf32> to vector<8x64xf32>
    %82 = vector.extract_strided_slice %78 {offsets = [0, 64], sizes = [8, 64], strides = [1, 1]} : vector<8x192xf32> to vector<8x64xf32>
    %83 = vector.extract_strided_slice %78 {offsets = [0, 128], sizes = [8, 64], strides = [1, 1]} : vector<8x192xf32> to vector<8x64xf32>
    %84 = arith.mulf %82, %57 : vector<8x64xf32>
    %85 = arith.mulf %81, %80 : vector<8x64xf32>
    %86 = arith.addf %84, %85 : vector<8x64xf32>
    %87 = math.tanh %86 : vector<8x64xf32>
    %88 = arith.mulf %83, %87 : vector<8x64xf32>
    %c2_i32 = arith.constant 2 : i32
    %c8_i32_28 = arith.constant 8 : i32
    %89 = arith.muli %c2_i32, %c8_i32_28 : i32
    %90 = tpu.assume_multiple %89, 8 : i32
    %c7_i32_29 = arith.constant 7 : i32
    %91 = arith.subi %c7_i32_29, %c2_i32 : i32
    %c8_i32_30 = arith.constant 8 : i32
    %92 = arith.muli %91, %c8_i32_30 : i32
    %93 = tpu.assume_multiple %92, 8 : i32
    %94 = arith.index_cast %90 : i32 to index
    %c0_31 = arith.constant 0 : index
    %95 = vector.load %arg6[%94, %c0_31] : memref<64x256xf32, #tpu.memory_space<vmem>>, vector<8x256xf32>
    %96 = arith.index_cast %93 : i32 to index
    %c0_32 = arith.constant 0 : index
    %97 = vector.load %arg6[%96, %c0_32] : memref<64x256xf32, #tpu.memory_space<vmem>>, vector<8x256xf32>
    %98 = arith.select %28, %95, %97 : vector<8x256xi1>, vector<8x256xf32>
    %99 = arith.truncf %88 : vector<8x64xf32> to vector<8x64xbf16>
    %cst_33 = arith.constant dense<0.000000e+00> : vector<8x256xf32>
    %100 = tpu.matmul %99, %7, %cst_33 {dimension_numbers = #tpu.dot_dimension_numbers<[1], [0], [0], [1], [0, 0, 1, 1], [], []>} : vector<8x64xbf16>, vector<64x256xbf16>, vector<8x256xf32> -> vector<8x256xf32>
    %101 = arith.addf %98, %100 : vector<8x256xf32>
    %102 = vector.extract_strided_slice %101 {offsets = [0, 0], sizes = [8, 192], strides = [1, 1]} : vector<8x256xf32> to vector<8x192xf32>
    %103 = arith.negf %102 : vector<8x192xf32>
    %104 = math.exp %103 : vector<8x192xf32>
    %cst_34 = arith.constant 1.000000e+00 : f32
    %105 = vector.broadcast %cst_34 : f32 to vector<8x192xf32>
    %106 = arith.addf %105, %104 : vector<8x192xf32>
    %107 = arith.divf %105, %106 : vector<8x192xf32>
    %108 = vector.extract_strided_slice %101 {offsets = [0, 192], sizes = [8, 64], strides = [1, 1]} : vector<8x256xf32> to vector<8x64xf32>
    %109 = math.tanh %108 : vector<8x64xf32>
    %110 = vector.extract_strided_slice %107 {offsets = [0, 0], sizes = [8, 64], strides = [1, 1]} : vector<8x192xf32> to vector<8x64xf32>
    %111 = vector.extract_strided_slice %107 {offsets = [0, 64], sizes = [8, 64], strides = [1, 1]} : vector<8x192xf32> to vector<8x64xf32>
    %112 = vector.extract_strided_slice %107 {offsets = [0, 128], sizes = [8, 64], strides = [1, 1]} : vector<8x192xf32> to vector<8x64xf32>
    %113 = arith.mulf %111, %86 : vector<8x64xf32>
    %114 = arith.mulf %110, %109 : vector<8x64xf32>
    %115 = arith.addf %113, %114 : vector<8x64xf32>
    %116 = math.tanh %115 : vector<8x64xf32>
    %117 = arith.mulf %112, %116 : vector<8x64xf32>
    %c3_i32 = arith.constant 3 : i32
    %c8_i32_35 = arith.constant 8 : i32
    %118 = arith.muli %c3_i32, %c8_i32_35 : i32
    %119 = tpu.assume_multiple %118, 8 : i32
    %c7_i32_36 = arith.constant 7 : i32
    %120 = arith.subi %c7_i32_36, %c3_i32 : i32
    %c8_i32_37 = arith.constant 8 : i32
    %121 = arith.muli %120, %c8_i32_37 : i32
    %122 = tpu.assume_multiple %121, 8 : i32
    %123 = arith.index_cast %119 : i32 to index
    %c0_38 = arith.constant 0 : index
    %124 = vector.load %arg6[%123, %c0_38] : memref<64x256xf32, #tpu.memory_space<vmem>>, vector<8x256xf32>
    %125 = arith.index_cast %122 : i32 to index
    %c0_39 = arith.constant 0 : index
    %126 = vector.load %arg6[%125, %c0_39] : memref<64x256xf32, #tpu.memory_space<vmem>>, vector<8x256xf32>
    %127 = arith.select %28, %124, %126 : vector<8x256xi1>, vector<8x256xf32>
    %128 = arith.truncf %117 : vector<8x64xf32> to vector<8x64xbf16>
    %cst_40 = arith.constant dense<0.000000e+00> : vector<8x256xf32>
    %129 = tpu.matmul %128, %7, %cst_40 {dimension_numbers = #tpu.dot_dimension_numbers<[1], [0], [0], [1], [0, 0, 1, 1], [], []>} : vector<8x64xbf16>, vector<64x256xbf16>, vector<8x256xf32> -> vector<8x256xf32>
    %130 = arith.addf %127, %129 : vector<8x256xf32>
    %131 = vector.extract_strided_slice %130 {offsets = [0, 0], sizes = [8, 192], strides = [1, 1]} : vector<8x256xf32> to vector<8x192xf32>
    %132 = arith.negf %131 : vector<8x192xf32>
    %133 = math.exp %132 : vector<8x192xf32>
    %cst_41 = arith.constant 1.000000e+00 : f32
    %134 = vector.broadcast %cst_41 : f32 to vector<8x192xf32>
    %135 = arith.addf %134, %133 : vector<8x192xf32>
    %136 = arith.divf %134, %135 : vector<8x192xf32>
    %137 = vector.extract_strided_slice %130 {offsets = [0, 192], sizes = [8, 64], strides = [1, 1]} : vector<8x256xf32> to vector<8x64xf32>
    %138 = math.tanh %137 : vector<8x64xf32>
    %139 = vector.extract_strided_slice %136 {offsets = [0, 0], sizes = [8, 64], strides = [1, 1]} : vector<8x192xf32> to vector<8x64xf32>
    %140 = vector.extract_strided_slice %136 {offsets = [0, 64], sizes = [8, 64], strides = [1, 1]} : vector<8x192xf32> to vector<8x64xf32>
    %141 = vector.extract_strided_slice %136 {offsets = [0, 128], sizes = [8, 64], strides = [1, 1]} : vector<8x192xf32> to vector<8x64xf32>
    %142 = arith.mulf %140, %115 : vector<8x64xf32>
    %143 = arith.mulf %139, %138 : vector<8x64xf32>
    %144 = arith.addf %142, %143 : vector<8x64xf32>
    %145 = math.tanh %144 : vector<8x64xf32>
    %146 = arith.mulf %141, %145 : vector<8x64xf32>
    %c4_i32 = arith.constant 4 : i32
    %c8_i32_42 = arith.constant 8 : i32
    %147 = arith.muli %c4_i32, %c8_i32_42 : i32
    %148 = tpu.assume_multiple %147, 8 : i32
    %c7_i32_43 = arith.constant 7 : i32
    %149 = arith.subi %c7_i32_43, %c4_i32 : i32
    %c8_i32_44 = arith.constant 8 : i32
    %150 = arith.muli %149, %c8_i32_44 : i32
    %151 = tpu.assume_multiple %150, 8 : i32
    %152 = arith.index_cast %148 : i32 to index
    %c0_45 = arith.constant 0 : index
    %153 = vector.load %arg6[%152, %c0_45] : memref<64x256xf32, #tpu.memory_space<vmem>>, vector<8x256xf32>
    %154 = arith.index_cast %151 : i32 to index
    %c0_46 = arith.constant 0 : index
    %155 = vector.load %arg6[%154, %c0_46] : memref<64x256xf32, #tpu.memory_space<vmem>>, vector<8x256xf32>
    %156 = arith.select %28, %153, %155 : vector<8x256xi1>, vector<8x256xf32>
    %157 = arith.truncf %146 : vector<8x64xf32> to vector<8x64xbf16>
    %cst_47 = arith.constant dense<0.000000e+00> : vector<8x256xf32>
    %158 = tpu.matmul %157, %7, %cst_47 {dimension_numbers = #tpu.dot_dimension_numbers<[1], [0], [0], [1], [0, 0, 1, 1], [], []>} : vector<8x64xbf16>, vector<64x256xbf16>, vector<8x256xf32> -> vector<8x256xf32>
    %159 = arith.addf %156, %158 : vector<8x256xf32>
    %160 = vector.extract_strided_slice %159 {offsets = [0, 0], sizes = [8, 192], strides = [1, 1]} : vector<8x256xf32> to vector<8x192xf32>
    %161 = arith.negf %160 : vector<8x192xf32>
    %162 = math.exp %161 : vector<8x192xf32>
    %cst_48 = arith.constant 1.000000e+00 : f32
    %163 = vector.broadcast %cst_48 : f32 to vector<8x192xf32>
    %164 = arith.addf %163, %162 : vector<8x192xf32>
    %165 = arith.divf %163, %164 : vector<8x192xf32>
    %166 = vector.extract_strided_slice %159 {offsets = [0, 192], sizes = [8, 64], strides = [1, 1]} : vector<8x256xf32> to vector<8x64xf32>
    %167 = math.tanh %166 : vector<8x64xf32>
    %168 = vector.extract_strided_slice %165 {offsets = [0, 0], sizes = [8, 64], strides = [1, 1]} : vector<8x192xf32> to vector<8x64xf32>
    %169 = vector.extract_strided_slice %165 {offsets = [0, 64], sizes = [8, 64], strides = [1, 1]} : vector<8x192xf32> to vector<8x64xf32>
    %170 = vector.extract_strided_slice %165 {offsets = [0, 128], sizes = [8, 64], strides = [1, 1]} : vector<8x192xf32> to vector<8x64xf32>
    %171 = arith.mulf %169, %144 : vector<8x64xf32>
    %172 = arith.mulf %168, %167 : vector<8x64xf32>
    %173 = arith.addf %171, %172 : vector<8x64xf32>
    %174 = math.tanh %173 : vector<8x64xf32>
    %175 = arith.mulf %170, %174 : vector<8x64xf32>
    %c5_i32 = arith.constant 5 : i32
    %c8_i32_49 = arith.constant 8 : i32
    %176 = arith.muli %c5_i32, %c8_i32_49 : i32
    %177 = tpu.assume_multiple %176, 8 : i32
    %c7_i32_50 = arith.constant 7 : i32
    %178 = arith.subi %c7_i32_50, %c5_i32 : i32
    %c8_i32_51 = arith.constant 8 : i32
    %179 = arith.muli %178, %c8_i32_51 : i32
    %180 = tpu.assume_multiple %179, 8 : i32
    %181 = arith.index_cast %177 : i32 to index
    %c0_52 = arith.constant 0 : index
    %182 = vector.load %arg6[%181, %c0_52] : memref<64x256xf32, #tpu.memory_space<vmem>>, vector<8x256xf32>
    %183 = arith.index_cast %180 : i32 to index
    %c0_53 = arith.constant 0 : index
    %184 = vector.load %arg6[%183, %c0_53] : memref<64x256xf32, #tpu.memory_space<vmem>>, vector<8x256xf32>
    %185 = arith.select %28, %182, %184 : vector<8x256xi1>, vector<8x256xf32>
    %186 = arith.truncf %175 : vector<8x64xf32> to vector<8x64xbf16>
    %cst_54 = arith.constant dense<0.000000e+00> : vector<8x256xf32>
    %187 = tpu.matmul %186, %7, %cst_54 {dimension_numbers = #tpu.dot_dimension_numbers<[1], [0], [0], [1], [0, 0, 1, 1], [], []>} : vector<8x64xbf16>, vector<64x256xbf16>, vector<8x256xf32> -> vector<8x256xf32>
    %188 = arith.addf %185, %187 : vector<8x256xf32>
    %189 = vector.extract_strided_slice %188 {offsets = [0, 0], sizes = [8, 192], strides = [1, 1]} : vector<8x256xf32> to vector<8x192xf32>
    %190 = arith.negf %189 : vector<8x192xf32>
    %191 = math.exp %190 : vector<8x192xf32>
    %cst_55 = arith.constant 1.000000e+00 : f32
    %192 = vector.broadcast %cst_55 : f32 to vector<8x192xf32>
    %193 = arith.addf %192, %191 : vector<8x192xf32>
    %194 = arith.divf %192, %193 : vector<8x192xf32>
    %195 = vector.extract_strided_slice %188 {offsets = [0, 192], sizes = [8, 64], strides = [1, 1]} : vector<8x256xf32> to vector<8x64xf32>
    %196 = math.tanh %195 : vector<8x64xf32>
    %197 = vector.extract_strided_slice %194 {offsets = [0, 0], sizes = [8, 64], strides = [1, 1]} : vector<8x192xf32> to vector<8x64xf32>
    %198 = vector.extract_strided_slice %194 {offsets = [0, 64], sizes = [8, 64], strides = [1, 1]} : vector<8x192xf32> to vector<8x64xf32>
    %199 = vector.extract_strided_slice %194 {offsets = [0, 128], sizes = [8, 64], strides = [1, 1]} : vector<8x192xf32> to vector<8x64xf32>
    %200 = arith.mulf %198, %173 : vector<8x64xf32>
    %201 = arith.mulf %197, %196 : vector<8x64xf32>
    %202 = arith.addf %200, %201 : vector<8x64xf32>
    %203 = math.tanh %202 : vector<8x64xf32>
    %204 = arith.mulf %199, %203 : vector<8x64xf32>
    %c6_i32 = arith.constant 6 : i32
    %c8_i32_56 = arith.constant 8 : i32
    %205 = arith.muli %c6_i32, %c8_i32_56 : i32
    %206 = tpu.assume_multiple %205, 8 : i32
    %c7_i32_57 = arith.constant 7 : i32
    %207 = arith.subi %c7_i32_57, %c6_i32 : i32
    %c8_i32_58 = arith.constant 8 : i32
    %208 = arith.muli %207, %c8_i32_58 : i32
    %209 = tpu.assume_multiple %208, 8 : i32
    %210 = arith.index_cast %206 : i32 to index
    %c0_59 = arith.constant 0 : index
    %211 = vector.load %arg6[%210, %c0_59] : memref<64x256xf32, #tpu.memory_space<vmem>>, vector<8x256xf32>
    %212 = arith.index_cast %209 : i32 to index
    %c0_60 = arith.constant 0 : index
    %213 = vector.load %arg6[%212, %c0_60] : memref<64x256xf32, #tpu.memory_space<vmem>>, vector<8x256xf32>
    %214 = arith.select %28, %211, %213 : vector<8x256xi1>, vector<8x256xf32>
    %215 = arith.truncf %204 : vector<8x64xf32> to vector<8x64xbf16>
    %cst_61 = arith.constant dense<0.000000e+00> : vector<8x256xf32>
    %216 = tpu.matmul %215, %7, %cst_61 {dimension_numbers = #tpu.dot_dimension_numbers<[1], [0], [0], [1], [0, 0, 1, 1], [], []>} : vector<8x64xbf16>, vector<64x256xbf16>, vector<8x256xf32> -> vector<8x256xf32>
    %217 = arith.addf %214, %216 : vector<8x256xf32>
    %218 = vector.extract_strided_slice %217 {offsets = [0, 0], sizes = [8, 192], strides = [1, 1]} : vector<8x256xf32> to vector<8x192xf32>
    %219 = arith.negf %218 : vector<8x192xf32>
    %220 = math.exp %219 : vector<8x192xf32>
    %cst_62 = arith.constant 1.000000e+00 : f32
    %221 = vector.broadcast %cst_62 : f32 to vector<8x192xf32>
    %222 = arith.addf %221, %220 : vector<8x192xf32>
    %223 = arith.divf %221, %222 : vector<8x192xf32>
    %224 = vector.extract_strided_slice %217 {offsets = [0, 192], sizes = [8, 64], strides = [1, 1]} : vector<8x256xf32> to vector<8x64xf32>
    %225 = math.tanh %224 : vector<8x64xf32>
    %226 = vector.extract_strided_slice %223 {offsets = [0, 0], sizes = [8, 64], strides = [1, 1]} : vector<8x192xf32> to vector<8x64xf32>
    %227 = vector.extract_strided_slice %223 {offsets = [0, 64], sizes = [8, 64], strides = [1, 1]} : vector<8x192xf32> to vector<8x64xf32>
    %228 = vector.extract_strided_slice %223 {offsets = [0, 128], sizes = [8, 64], strides = [1, 1]} : vector<8x192xf32> to vector<8x64xf32>
    %229 = arith.mulf %227, %202 : vector<8x64xf32>
    %230 = arith.mulf %226, %225 : vector<8x64xf32>
    %231 = arith.addf %229, %230 : vector<8x64xf32>
    %232 = math.tanh %231 : vector<8x64xf32>
    %233 = arith.mulf %228, %232 : vector<8x64xf32>
    %c7_i32_63 = arith.constant 7 : i32
    %c8_i32_64 = arith.constant 8 : i32
    %234 = arith.muli %c7_i32_63, %c8_i32_64 : i32
    %235 = tpu.assume_multiple %234, 8 : i32
    %c7_i32_65 = arith.constant 7 : i32
    %236 = arith.subi %c7_i32_65, %c7_i32_63 : i32
    %c8_i32_66 = arith.constant 8 : i32
    %237 = arith.muli %236, %c8_i32_66 : i32
    %238 = tpu.assume_multiple %237, 8 : i32
    %239 = arith.index_cast %235 : i32 to index
    %c0_67 = arith.constant 0 : index
    %240 = vector.load %arg6[%239, %c0_67] : memref<64x256xf32, #tpu.memory_space<vmem>>, vector<8x256xf32>
    %241 = arith.index_cast %238 : i32 to index
    %c0_68 = arith.constant 0 : index
    %242 = vector.load %arg6[%241, %c0_68] : memref<64x256xf32, #tpu.memory_space<vmem>>, vector<8x256xf32>
    %243 = arith.select %28, %240, %242 : vector<8x256xi1>, vector<8x256xf32>
    %244 = arith.truncf %233 : vector<8x64xf32> to vector<8x64xbf16>
    %cst_69 = arith.constant dense<0.000000e+00> : vector<8x256xf32>
    %245 = tpu.matmul %244, %7, %cst_69 {dimension_numbers = #tpu.dot_dimension_numbers<[1], [0], [0], [1], [0, 0, 1, 1], [], []>} : vector<8x64xbf16>, vector<64x256xbf16>, vector<8x256xf32> -> vector<8x256xf32>
    %246 = arith.addf %243, %245 : vector<8x256xf32>
    %247 = vector.extract_strided_slice %246 {offsets = [0, 0], sizes = [8, 192], strides = [1, 1]} : vector<8x256xf32> to vector<8x192xf32>
    %248 = arith.negf %247 : vector<8x192xf32>
    %249 = math.exp %248 : vector<8x192xf32>
    %cst_70 = arith.constant 1.000000e+00 : f32
    %250 = vector.broadcast %cst_70 : f32 to vector<8x192xf32>
    %251 = arith.addf %250, %249 : vector<8x192xf32>
    %252 = arith.divf %250, %251 : vector<8x192xf32>
    %253 = vector.extract_strided_slice %246 {offsets = [0, 192], sizes = [8, 64], strides = [1, 1]} : vector<8x256xf32> to vector<8x64xf32>
    %254 = math.tanh %253 : vector<8x64xf32>
    %255 = vector.extract_strided_slice %252 {offsets = [0, 0], sizes = [8, 64], strides = [1, 1]} : vector<8x192xf32> to vector<8x64xf32>
    %256 = vector.extract_strided_slice %252 {offsets = [0, 64], sizes = [8, 64], strides = [1, 1]} : vector<8x192xf32> to vector<8x64xf32>
    %257 = vector.extract_strided_slice %252 {offsets = [0, 128], sizes = [8, 64], strides = [1, 1]} : vector<8x192xf32> to vector<8x64xf32>
    %258 = arith.mulf %256, %231 : vector<8x64xf32>
    %259 = arith.mulf %255, %254 : vector<8x64xf32>
    %260 = arith.addf %258, %259 : vector<8x64xf32>
    %261 = math.tanh %260 : vector<8x64xf32>
    %262 = arith.mulf %257, %261 : vector<8x64xf32>
    %c8_i32_71 = arith.constant 8 : i32
    %cst_72 = arith.constant 0.000000e+00 : f32
    %263 = vector.broadcast %cst_72 : f32 to vector<8x64xf32>
    %264 = tpu.concatenate %262, %263 in 1 : vector<8x64xf32>, vector<8x64xf32> -> vector<8x128xf32>
    %c0_73 = arith.constant 0 : index
    %c0_74 = arith.constant 0 : index
    %265 = vector.load %arg5[%c0_73, %c0_74] : memref<8x128xf32, #tpu.memory_space<vmem>>, vector<8x128xf32>
    tpu.vector_store %arg5[%c0_73, %c0_74], %264 {strides = array<i32>} : memref<8x128xf32, #tpu.memory_space<vmem>>, vector<8x128xf32>,
    return
  }
  func.func @transform_0(%arg0: i32) -> (i32, i32) {
    %c0_i32 = arith.constant 0 : i32
    %c0_i32_0 = arith.constant 0 : i32
    return %arg0, %c0_i32 : i32, i32
  }
  func.func @transform_1(%arg0: i32) -> (i32, i32) {
    %c0_i32 = arith.constant 0 : i32
    %c0_i32_0 = arith.constant 0 : i32
    %c0_i32_1 = arith.constant 0 : i32
    return %c0_i32, %c0_i32_0 : i32, i32
  }
  func.func @transform_2(%arg0: i32) -> (i32, i32) {
    %c0_i32 = arith.constant 0 : i32
    %c0_i32_0 = arith.constant 0 : i32
    %c0_i32_1 = arith.constant 0 : i32
    return %c0_i32, %c0_i32_0 : i32, i32
  }
  func.func @transform_3(%arg0: i32) -> (i32, i32) {
    %c0_i32 = arith.constant 0 : i32
    %c0_i32_0 = arith.constant 0 : i32
    %c0_i32_1 = arith.constant 0 : i32
    return %c0_i32, %c0_i32_0 : i32, i32
  }
  func.func @transform_4(%arg0: i32) -> (i32, i32) {
    %c0_i32 = arith.constant 0 : i32
    %c0_i32_0 = arith.constant 0 : i32
    return %arg0, %c0_i32 : i32, i32
  }
}

</mosaic_0001>

<llo_original>
// kernel: tpu_custom_call.1
$region0: #{tpu_custom_call.1}
  #allocation0 [shape = 'u32[]', space=smem, size = 0x4, offset = 0x4, fixed_abs, tag = 'smem constant byte address 0x4 - core index']
  #allocation1 [shape = 'u32[72,128]{1,0:T(1,128)}', space=vmem, size = 0x9000, scoped, tag = 'internal scratch']
  #allocation2 [shape = 'f32[64,256]{1,0:T(8,128)}', space=vmem, size = 0x10000, scoped, tag = 'scratch operand']
  %s0 = inlined_call_operand.vmem [shape: bf16[64,16], index: 0, kind: input, shape index: {}]
  %s1 = inlined_call_operand.vmem [shape: bf16[16,256], index: 1, kind: input, shape index: {}]
  %s2 = inlined_call_operand.hbm [shape: bf16[64,256], index: 2, kind: input, shape index: {}]
  %s3 = inlined_call_operand.vmem [shape: f32[1,256], index: 3, kind: input, shape index: {}]
  %s4 = inlined_call_operand.hbm [shape: f32[8,128], index: 4, kind: output, shape index: {}]
  %s5 = sld [smem:[#allocation0]]
  $region30: #{tpu_custom_call.1} parent=0
    _
  %s7 = ssub.s32 1, %s5
  %s8 = scalar_select 0, %s7, %s5
  $region1: #{tpu_custom_call.1} parent=0
    #allocation3 [shape = 'u8[32768]{0}', space=vmem, size = 0x8000, scoped, tag = 'input window, operand 2, single buffered']
    #allocation4 [shape = 's32[1]{0}', space=sflag, size = 0x4, scoped, tag = 'scoped memory for tpu_custom_call.1']
    #allocation5 [shape = 's32[1]{0}', space=sflag, size = 0x4, scoped, tag = 'scoped memory for tpu_custom_call.1']
    #allocation6 [shape = 'u8[4096]{0}', space=vmem, size = 0x1000, scoped, tag = 'output window, operand 0, single buffered']
    %9 = vsyncpa [#allocation4], 0
    %10 = vsyncpa [#allocation5], 0
    // Predicated region
    $region2: #{tpu_custom_call.1} parent=1 // pred_check
      _
    $region3: #{tpu_custom_call.1} parent=1 // pred_check_branch
      %12 = sbr.rel (0) target = $region5
    $region4: #{tpu_custom_call.1} parent=1 // pred_region
      _
    $region5: #{tpu_custom_call.1} parent=1 // pred_fallthru
      _
    // Predicated region
    $region6: #{tpu_custom_call.1} parent=1 // pred_check
      _
    $region7: #{tpu_custom_call.1} parent=1 // pred_check_branch
      %14 = sbr.rel (0) target = $region9
    $region8: #{tpu_custom_call.1} parent=1 // pred_region
      _
    $region9: #{tpu_custom_call.1} parent=1 // pred_fallthru
      _
    // Predicated region
    $region10: #{tpu_custom_call.1} parent=1 // pred_check
      _
    $region11: #{tpu_custom_call.1} parent=1 // pred_check_branch
      %16 = sbr.rel (0) target = $region13
    $region12: #{tpu_custom_call.1} parent=1 // pred_region
      %18 = vsyncadd [#allocation4], 0
      %s19 = sshll.u32 %s2, 4
      %s20 = int_to_ptr.hbm [resolvable:$true] %s19
      %s21 = sshll.u32 [#allocation3], 4
      %s22 = int_to_ptr.vmem [resolvable:$true] %s21
      %27 = dma.hbm_to_vmem [thread:$0]  %s20, 1024, %s22, [#allocation4], 128, 128, 8
    $region13: #{tpu_custom_call.1} parent=1 // pred_fallthru
      _
    // Predicated region
    $region14: #{tpu_custom_call.1} parent=1 // pred_check
      _
    $region15: #{tpu_custom_call.1} parent=1 // pred_check_branch
      %29 = sbr.rel (0) target = $region17
    $region16: #{tpu_custom_call.1} parent=1 // pred_region
      _
    $region17: #{tpu_custom_call.1} parent=1 // pred_fallthru
      _
    // Predicated region
    $region18: #{tpu_custom_call.1} parent=1 // pred_check
      _
    $region19: #{tpu_custom_call.1} parent=1 // pred_check_branch
      %31 = sbr.rel (0) target = $region21
    $region20: #{tpu_custom_call.1} parent=1 // pred_region
      %33 = dma.done [#allocation4], 1024
    $region21: #{tpu_custom_call.1} parent=1 // pred_fallthru
      _
    %v35 = vld [vmem:[%s0] sm:$0xf]
    %v36 = vld [vmem:[%s0 + $0x4] sm:$0xf]
    %v37 = vld [vmem:[%s0 + $0x8] sm:$0xf]
    %v38 = vld [vmem:[%s0 + $0xc] sm:$0xf]
    %v39 = vld [vmem:[%s0 + $0x10] sm:$0xf]
    %v40 = vld [vmem:[%s0 + $0x14] sm:$0xf]
    %v41 = vld [vmem:[%s0 + $0x18] sm:$0xf]
    %v42 = vld [vmem:[%s0 + $0x1c] sm:$0xf]
    %v43 = vld [vmem:[%s1] sm:$0xff]
    %v44 = vld [vmem:[%s1 + $0x8] sm:$0xff]
    %v45 = vld [vmem:[%s3] sm:$0x3]
    %v47 = vperm.slane %v45, 0
    %v48 = vperm.slane %v45, 1
    %v59 = vunpack.c.l.b16 %v35
    %v60 = vunpack.c.l.b16 %v36
    %v61 = vunpack.c.l.b16 %v37
    %v62 = vunpack.c.l.b16 %v38
    %v63 = vunpack.c.l.b16 %v39
    %v64 = vunpack.c.l.b16 %v40
    %v65 = vunpack.c.l.b16 %v41
    %v66 = vunpack.c.l.b16 %v42
    %v67 = vpack.c.b16 %v60, %v59
    %v68 = vpack.c.b16 %v62, %v61
    %v69 = vpack.c.b16 %v64, %v63
    %v70 = vpack.c.b16 %v66, %v65
    %v73 = vunpack.c.l.b16 %v43
    %v74 = vunpack.c.h.b16 %v43
    %v75 = vunpack.c.l.b16 %v44
    %v76 = vunpack.c.h.b16 %v44
    %v77 = vpack.c.b16 %v75, %v73
    %v78 = vpack.c.b16 %v76, %v74
    %vm81 = vcmask 130048
    %v83 = vsel %vm81, %v67, 0
    %v86 = vsel %vm81, %v68, 0
    %v89 = vsel %vm81, %v69, 0
    %v92 = vsel %vm81, %v70, 0
    %94 = vmatpush.bf16.msra.mxu0 0
    %95 = vmatpush.bf16.msra.mxu0 0
    %96 = vmatpush.bf16.msra.mxu0 0
    %97 = vmatpush.bf16.msra.mxu0 0
    %98 = vmatpush.bf16.msra.mxu0 0
    %99 = vmatpush.bf16.msra.mxu0 0
    %100 = vmatpush.bf16.msra.mxu0 0
    %101 = vmatpush.bf16.msra.mxu0 %v77
    %102 = vmatmul.bf16.gmra.mxu0 %v83
    %v103 = vpop.f32.mrf.mxu0
    %v104 = vadd.f32 %v47, %v103
    %v105 = vpop.f32.mrf.mxu0
    %v106 = vadd.f32 %v47, %v105
    %107 = vmatmul.bf16.gmra.mxu0 %v86
    %v108 = vpop.f32.mrf.mxu0
    %v109 = vadd.f32 %v47, %v108
    %v110 = vpop.f32.mrf.mxu0
    %v111 = vadd.f32 %v47, %v110
    %112 = vmatmul.bf16.gmra.mxu0 %v89
    %v113 = vpop.f32.mrf.mxu0
    %v114 = vadd.f32 %v47, %v113
    %v115 = vpop.f32.mrf.mxu0
    %v116 = vadd.f32 %v47, %v115
    %117 = vmatmul.bf16.gmra.mxu0 %v92
    %v118 = vpop.f32.mrf.mxu0
    %v119 = vadd.f32 %v47, %v118
    %v120 = vpop.f32.mrf.mxu0
    %v121 = vadd.f32 %v47, %v120
    %122 = vdwg.mxu0
    %123 = vmatpush.bf16.msra.mxu0 0
    %124 = vmatpush.bf16.msra.mxu0 0
    %125 = vmatpush.bf16.msra.mxu0 0
    %126 = vmatpush.bf16.msra.mxu0 0
    %127 = vmatpush.bf16.msra.mxu0 0
    %128 = vmatpush.bf16.msra.mxu0 0
    %129 = vmatpush.bf16.msra.mxu0 0
    %130 = vmatpush.bf16.msra.mxu0 %v78
    %131 = vmatmul.bf16.gmra.mxu0 %v83
    %v132 = vpop.f32.mrf.mxu0
    %v133 = vadd.f32 %v48, %v132
    %v134 = vpop.f32.mrf.mxu0
    %v135 = vadd.f32 %v48, %v134
    %136 = vmatmul.bf16.gmra.mxu0 %v86
    %v137 = vpop.f32.mrf.mxu0
    %v138 = vadd.f32 %v48, %v137
    %v139 = vpop.f32.mrf.mxu0
    %v140 = vadd.f32 %v48, %v139
    %141 = vmatmul.bf16.gmra.mxu0 %v89
    %v142 = vpop.f32.mrf.mxu0
    %v143 = vadd.f32 %v48, %v142
    %v144 = vpop.f32.mrf.mxu0
    %v145 = vadd.f32 %v48, %v144
    %146 = vmatmul.bf16.gmra.mxu0 %v92
    %v147 = vpop.f32.mrf.mxu0
    %v148 = vadd.f32 %v48, %v147
    %v149 = vpop.f32.mrf.mxu0
    %v150 = vadd.f32 %v48, %v149
    %151 = vdwg.mxu0
    %152 = vst [vmem:[#allocation2] sm:$0xff] %v104
    %153 = vst [vmem:[#allocation2 + $0x8] sm:$0xff] %v133
    %154 = vst [vmem:[#allocation2 + $0x10] sm:$0xff] %v106
    %155 = vst [vmem:[#allocation2 + $0x18] sm:$0xff] %v135
    %156 = vst [vmem:[#allocation2 + $0x20] sm:$0xff] %v109
    %157 = vst [vmem:[#allocation2 + $0x28] sm:$0xff] %v138
    %158 = vst [vmem:[#allocation2 + $0x30] sm:$0xff] %v111
    %159 = vst [vmem:[#allocation2 + $0x38] sm:$0xff] %v140
    %160 = vst [vmem:[#allocation2 + $0x40] sm:$0xff] %v114
    %161 = vst [vmem:[#allocation2 + $0x48] sm:$0xff] %v143
    %162 = vst [vmem:[#allocation2 + $0x50] sm:$0xff] %v116
    %163 = vst [vmem:[#allocation2 + $0x58] sm:$0xff] %v145
    %164 = vst [vmem:[#allocation2 + $0x60] sm:$0xff] %v119
    %165 = vst [vmem:[#allocation2 + $0x68] sm:$0xff] %v148
    %166 = vst [vmem:[#allocation2 + $0x70] sm:$0xff] %v121
    %167 = vst [vmem:[#allocation2 + $0x78] sm:$0xff] %v150
    %v168 = vld [vmem:[#allocation3] sm:$0xff]
    %v169 = vld [vmem:[#allocation3 + $0x8] sm:$0xff]
    %v170 = vld [vmem:[#allocation3 + $0x10] sm:$0xff]
    %v171 = vld [vmem:[#allocation3 + $0x18] sm:$0xff]
    %v172 = vld [vmem:[#allocation3 + $0x20] sm:$0xff]
    %v173 = vld [vmem:[#allocation3 + $0x28] sm:$0xff]
    %v174 = vld [vmem:[#allocation3 + $0x30] sm:$0xff]
    %v175 = vld [vmem:[#allocation3 + $0x38] sm:$0xff]
    %v176 = vlaneseq
    %v177 = vand.u32 %v176, 127
    %v178 = vadd.s32 %v177, 128
    %vm179 = vcmp.lt.s32.totalorder %v177, 0
    %v180 = vsub.s32 0, %v177
    %v181 = vsel %vm179, %v180, %v177
    %v182 = vshrl.u32 %v181, 6
    %v183 = vand.u32 %v181, 63
    %v184 = vsub.s32 0, %v183
    %v185 = vsel %vm179, %v184, %v183
    %vm186 = vcmp.lt.s32.totalorder %v178, 0
    %v187 = vsub.s32 0, %v178
    %v188 = vsel %vm186, %v187, %v178
    %v189 = vshrl.u32 %v188, 6
    %v190 = vand.u32 %v188, 63
    %v191 = vsub.s32 0, %v190
    %v192 = vsel %vm186, %v191, %v190
    %vm193 = vcmp.ne.s32.totalorder %v185, 0
    %vm194 = vcmp.ne.s32.totalorder %v192, 0
    %vm195 = vcmp.lt.s32.totalorder %v185, 0
    %vm196 = vcmp.lt.s32.totalorder %v192, 0
    %vm197 = vmand %vm195, %vm193
    %vm198 = vmand %vm196, %vm194
    %v199 = vadd.s32 %v185, 64
    %v200 = vadd.s32 %v192, 64
    %v201 = vsel %vm197, %v199, %v185
    %v202 = vsel %vm198, %v200, %v192
    %vm203 = vcmp.lt.s32.totalorder %v201, 32
    %vm204 = vcmp.lt.s32.totalorder %v202, 32
    %v205 = vsel %vm203, 1, 0
    %v206 = vsel %vm204, 1, 0
    %vm207 = vcmp.eq.s32.totalorder %v205, 1
    %vm208 = vcmp.eq.s32.totalorder %v206, 1
    %s209 = smul.u32 0, 2
    %s210 = smul.addr %s209, 8
    %s211 = scalar_lea.vmem [#allocation2], %s210
    %v212 = vld [vmem:[%s211] sm:$0xff]
    %v213 = vld [vmem:[%s211 + $0x8] sm:$0xff]
    %s214 = smul.u32 7, 2
    %s215 = smul.addr %s214, 8
    %s216 = scalar_lea.vmem [#allocation2], %s215
    %v217 = vld [vmem:[%s216] sm:$0xff]
    %v218 = vld [vmem:[%s216 + $0x8] sm:$0xff]
    %v219 = vsel %vm207, %v212, %v217
    %v220 = vsel %vm208, %v213, %v218
    %v229 = vunpack.c.l.b16 %v168
    %v230 = vunpack.c.h.b16 %v168
    %v231 = vunpack.c.l.b16 %v169
    %v232 = vunpack.c.h.b16 %v169
    %v233 = vunpack.c.l.b16 %v170
    %v234 = vunpack.c.h.b16 %v170
    %v235 = vunpack.c.l.b16 %v171
    %v236 = vunpack.c.h.b16 %v171
    %v237 = vunpack.c.l.b16 %v172
    %v238 = vunpack.c.h.b16 %v172
    %v239 = vunpack.c.l.b16 %v173
    %v240 = vunpack.c.h.b16 %v173
    %v241 = vunpack.c.l.b16 %v174
    %v242 = vunpack.c.h.b16 %v174
    %v243 = vunpack.c.l.b16 %v175
    %v244 = vunpack.c.h.b16 %v175
    %v245 = vpack.c.b16 %v231, %v229
    %v246 = vpack.c.b16 %v232, %v230
    %v247 = vpack.c.b16 %v235, %v233
    %v248 = vpack.c.b16 %v236, %v234
    %v249 = vpack.c.b16 %v239, %v237
    %v250 = vpack.c.b16 %v240, %v238
    %v251 = vpack.c.b16 %v243, %v241
    %v252 = vpack.c.b16 %v244, %v242
    %vm261 = vcmask 523264
    %v263 = vsel %vm261, 0, 0
    %265 = vmatpush.bf16.msra.mxu0 0
    %266 = vmatpush.bf16.msra.mxu0 0
    %267 = vmatpush.bf16.msra.mxu0 0
    %268 = vmatpush.bf16.msra.mxu0 0
    %269 = vmatpush.bf16.msra.mxu0 %v251
    %270 = vmatpush.bf16.msra.mxu0 %v249
    %271 = vmatpush.bf16.msra.mxu0 %v247
    %272 = vmatpush.bf16.msra.mxu0 %v245
    %273 = vmatmul.bf16.gmra.mxu0 %v263
    %v274 = vpop.f32.mrf.mxu0
    %v275 = vadd.f32 0.0, %v274
    %v276 = vpop.f32.mrf.mxu0
    %277 = vdwg.mxu0
    %278 = vmatpush.bf16.msra.mxu0 0
    %279 = vmatpush.bf16.msra.mxu0 0
    %280 = vmatpush.bf16.msra.mxu0 0
    %281 = vmatpush.bf16.msra.mxu0 0
    %282 = vmatpush.bf16.msra.mxu0 %v252
    %283 = vmatpush.bf16.msra.mxu0 %v250
    %284 = vmatpush.bf16.msra.mxu0 %v248
    %285 = vmatpush.bf16.msra.mxu0 %v246
    %286 = vmatmul.bf16.gmra.mxu0 %v263
    %v287 = vpop.f32.mrf.mxu0
    %v288 = vadd.f32 0.0, %v287
    %v289 = vpop.f32.mrf.mxu0
    %290 = vdwg.mxu0
    %v291 = vadd.f32 %v219, %v275
    %v292 = vadd.f32 %v220, %v288
    %v293 = vxor.u32 %v291, 2147483648
    %v294 = vxor.u32 %v292, 2147483648
    %v295 = vmul.f32 %v293, 1.442695
    %v296 = vpow.pop %v295
    %v297 = vmul.f32 %v294, 1.442695
    %v298 = vpow.pop %v297
    %v299 = vadd.f32 %v296, 1.0
    %v300 = vadd.f32 %v298, 1.0
    %v301 = vrcp.pop %v299
    %v302 = vmul.f32 %v299, %v301
    %v303 = vsub.f32 1.0, %v302
    %v304 = vmul.f32 %v301, %v303
    %v305 = vadd.f32 %v301, %v304
    %vm306 = vweird.f32 %v299
    %vm307 = vweird.f32 %v301
    %vm308 = vmor %vm306, %vm307
    %v309 = vsel %vm308, %v301, %v305
    %v310 = vand.u32 2147483647, %v299
    %vm311 = vcmp.eq.f32.partialorder %v310, 8.507059e+37
    %v312 = vand.u32 %v299, 2147483648
    %v313 = vor.u32 1.1754944e-38, %v312
    %v314 = vsel %vm311, %v313, %v309
    %v315 = vmul.f32 1.0, %v314
    %v316 = vrcp.pop %v300
    %v317 = vmul.f32 %v300, %v316
    %v318 = vsub.f32 1.0, %v317
    %v319 = vmul.f32 %v316, %v318
    %v320 = vadd.f32 %v316, %v319
    %vm321 = vweird.f32 %v300
    %vm322 = vweird.f32 %v316
    %vm323 = vmor %vm321, %vm322
    %v324 = vsel %vm323, %v316, %v320
    %v325 = vand.u32 2147483647, %v300
    %vm326 = vcmp.eq.f32.partialorder %v325, 8.507059e+37
    %v327 = vand.u32 %v300, 2147483648
    %v328 = vor.u32 1.1754944e-38, %v327
    %v329 = vsel %vm326, %v328, %v324
    %v330 = vmul.f32 1.0, %v329
    %v331 = vtanh.pop %v292
    %v332 = vmul.f32 %v315, 0.0
    %334 = vrot.lane.b32.xlu0 %v331, 64
    %v335 = vpop.permute.xlu0 %334
    %v337 = vmul.f32 %v315, %v335
    %339 = vrot.lane.b32.xlu0 %v337, 64
    %v340 = vpop.permute.xlu0 %339
    %v342 = vadd.f32 %v332, %v340
    %v343 = vtanh.pop %v342
    %345 = vrot.lane.b32.xlu0 %v343, 64
    %v346 = vpop.permute.xlu0 %345
    %v348 = vmul.f32 %v330, %v346
    %s349 = smul.u32 1, 2
    %s350 = smul.addr %s349, 8
    %s351 = scalar_lea.vmem [#allocation2], %s350
    %v352 = vld [vmem:[%s351] sm:$0xff]
    %v353 = vld [vmem:[%s351 + $0x8] sm:$0xff]
    %s354 = smul.u32 6, 2
    %s355 = smul.addr %s354, 8
    %s356 = scalar_lea.vmem [#allocation2], %s355
    %v357 = vld [vmem:[%s356] sm:$0xff]
    %v358 = vld [vmem:[%s356 + $0x8] sm:$0xff]
    %v359 = vsel %vm207, %v352, %v357
    %v360 = vsel %vm208, %v353, %v358
    %v361 = vpack.c.bf16 %v348, %v348
    %v363 = vsel %vm261, %v361, 0
    %365 = vmatpush.bf16.msra.mxu0 0
    %366 = vmatpush.bf16.msra.mxu0 0
    %367 = vmatpush.bf16.msra.mxu0 0
    %368 = vmatpush.bf16.msra.mxu0 0
    %369 = vmatpush.bf16.msra.mxu0 %v251
    %370 = vmatpush.bf16.msra.mxu0 %v249
    %371 = vmatpush.bf16.msra.mxu0 %v247
    %372 = vmatpush.bf16.msra.mxu0 %v245
    %373 = vmatmul.bf16.gmra.mxu0 %v363
    %v374 = vpop.f32.mrf.mxu0
    %v375 = vadd.f32 0.0, %v374
    %v376 = vpop.f32.mrf.mxu0
    %377 = vdwg.mxu0
    %378 = vmatpush.bf16.msra.mxu0 0
    %379 = vmatpush.bf16.msra.mxu0 0
    %380 = vmatpush.bf16.msra.mxu0 0
    %381 = vmatpush.bf16.msra.mxu0 0
    %382 = vmatpush.bf16.msra.mxu0 %v252
    %383 = vmatpush.bf16.msra.mxu0 %v250
    %384 = vmatpush.bf16.msra.mxu0 %v248
    %385 = vmatpush.bf16.msra.mxu0 %v246
    %386 = vmatmul.bf16.gmra.mxu0 %v363
    %v387 = vpop.f32.mrf.mxu0
    %v388 = vadd.f32 0.0, %v387
    %v389 = vpop.f32.mrf.mxu0
    %390 = vdwg.mxu0
    %v391 = vadd.f32 %v359, %v375
    %v392 = vadd.f32 %v360, %v388
    %v393 = vxor.u32 %v391, 2147483648
    %v394 = vxor.u32 %v392, 2147483648
    %v395 = vmul.f32 %v393, 1.442695
    %v396 = vpow.pop %v395
    %v397 = vmul.f32 %v394, 1.442695
    %v398 = vpow.pop %v397
    %v399 = vadd.f32 %v396, 1.0
    %v400 = vadd.f32 %v398, 1.0
    %v401 = vrcp.pop %v399
    %v402 = vmul.f32 %v399, %v401
    %v403 = vsub.f32 1.0, %v402
    %v404 = vmul.f32 %v401, %v403
    %v405 = vadd.f32 %v401, %v404
    %vm406 = vweird.f32 %v399
    %vm407 = vweird.f32 %v401
    %vm408 = vmor %vm406, %vm407
    %v409 = vsel %vm408, %v401, %v405
    %v410 = vand.u32 2147483647, %v399
    %vm411 = vcmp.eq.f32.partialorder %v410, 8.507059e+37
    %v412 = vand.u32 %v399, 2147483648
    %v413 = vor.u32 1.1754944e-38, %v412
    %v414 = vsel %vm411, %v413, %v409
    %v415 = vmul.f32 1.0, %v414
    %v416 = vrcp.pop %v400
    %v417 = vmul.f32 %v400, %v416
    %v418 = vsub.f32 1.0, %v417
    %v419 = vmul.f32 %v416, %v418
    %v420 = vadd.f32 %v416, %v419
    %vm421 = vweird.f32 %v400
    %vm422 = vweird.f32 %v416
    %vm423 = vmor %vm421, %vm422
    %v424 = vsel %vm423, %v416, %v420
    %v425 = vand.u32 2147483647, %v400
    %vm426 = vcmp.eq.f32.partialorder %v425, 8.507059e+37
    %v427 = vand.u32 %v400, 2147483648
    %v428 = vor.u32 1.1754944e-38, %v427
    %v429 = vsel %vm426, %v428, %v424
    %v430 = vmul.f32 1.0, %v429
    %v431 = vtanh.pop %v392
    %v432 = vmul.f32 %v415, %v342
    %434 = vrot.lane.b32.xlu0 %v431, 64
    %v435 = vpop.permute.xlu0 %434
    %v437 = vmul.f32 %v415, %v435
    %439 = vrot.lane.b32.xlu0 %v437, 64
    %v440 = vpop.permute.xlu0 %439
    %v442 = vadd.f32 %v432, %v440
    %v443 = vtanh.pop %v442
    %445 = vrot.lane.b32.xlu0 %v443, 64
    %v446 = vpop.permute.xlu0 %445
    %v448 = vmul.f32 %v430, %v446
    %s449 = smul.u32 2, 2
    %s450 = smul.addr %s449, 8
    %s451 = scalar_lea.vmem [#allocation2], %s450
    %v452 = vld [vmem:[%s451] sm:$0xff]
    %v453 = vld [vmem:[%s451 + $0x8] sm:$0xff]
    %s454 = smul.u32 5, 2
    %s455 = smul.addr %s454, 8
    %s456 = scalar_lea.vmem [#allocation2], %s455
    %v457 = vld [vmem:[%s456] sm:$0xff]
    %v458 = vld [vmem:[%s456 + $0x8] sm:$0xff]
    %v459 = vsel %vm207, %v452, %v457
    %v460 = vsel %vm208, %v453, %v458
    %v461 = vpack.c.bf16 %v448, %v448
    %v463 = vsel %vm261, %v461, 0
    %465 = vmatpush.bf16.msra.mxu0 0
    %466 = vmatpush.bf16.msra.mxu0 0
    %467 = vmatpush.bf16.msra.mxu0 0
    %468 = vmatpush.bf16.msra.mxu0 0
    %469 = vmatpush.bf16.msra.mxu0 %v251
    %470 = vmatpush.bf16.msra.mxu0 %v249
    %471 = vmatpush.bf16.msra.mxu0 %v247
    %472 = vmatpush.bf16.msra.mxu0 %v245
    %473 = vmatmul.bf16.gmra.mxu0 %v463
    %v474 = vpop.f32.mrf.mxu0
    %v475 = vadd.f32 0.0, %v474
    %v476 = vpop.f32.mrf.mxu0
    %477 = vdwg.mxu0
    %478 = vmatpush.bf16.msra.mxu0 0
    %479 = vmatpush.bf16.msra.mxu0 0
    %480 = vmatpush.bf16.msra.mxu0 0
    %481 = vmatpush.bf16.msra.mxu0 0
    %482 = vmatpush.bf16.msra.mxu0 %v252
    %483 = vmatpush.bf16.msra.mxu0 %v250
    %484 = vmatpush.bf16.msra.mxu0 %v248
    %485 = vmatpush.bf16.msra.mxu0 %v246
    %486 = vmatmul.bf16.gmra.mxu0 %v463
    %v487 = vpop.f32.mrf.mxu0
    %v488 = vadd.f32 0.0, %v487
    %v489 = vpop.f32.mrf.mxu0
    %490 = vdwg.mxu0
    %v491 = vadd.f32 %v459, %v475
    %v492 = vadd.f32 %v460, %v488
    %v493 = vxor.u32 %v491, 2147483648
    %v494 = vxor.u32 %v492, 2147483648
    %v495 = vmul.f32 %v493, 1.442695
    %v496 = vpow.pop %v495
    %v497 = vmul.f32 %v494, 1.442695
    %v498 = vpow.pop %v497
    %v499 = vadd.f32 %v496, 1.0
    %v500 = vadd.f32 %v498, 1.0
    %v501 = vrcp.pop %v499
    %v502 = vmul.f32 %v499, %v501
    %v503 = vsub.f32 1.0, %v502
    %v504 = vmul.f32 %v501, %v503
    %v505 = vadd.f32 %v501, %v504
    %vm506 = vweird.f32 %v499
    %vm507 = vweird.f32 %v501
    %vm508 = vmor %vm506, %vm507
    %v509 = vsel %vm508, %v501, %v505
    %v510 = vand.u32 2147483647, %v499
    %vm511 = vcmp.eq.f32.partialorder %v510, 8.507059e+37
    %v512 = vand.u32 %v499, 2147483648
    %v513 = vor.u32 1.1754944e-38, %v512
    %v514 = vsel %vm511, %v513, %v509
    %v515 = vmul.f32 1.0, %v514
    %v516 = vrcp.pop %v500
    %v517 = vmul.f32 %v500, %v516
    %v518 = vsub.f32 1.0, %v517
    %v519 = vmul.f32 %v516, %v518
    %v520 = vadd.f32 %v516, %v519
    %vm521 = vweird.f32 %v500
    %vm522 = vweird.f32 %v516
    %vm523 = vmor %vm521, %vm522
    %v524 = vsel %vm523, %v516, %v520
    %v525 = vand.u32 2147483647, %v500
    %vm526 = vcmp.eq.f32.partialorder %v525, 8.507059e+37
    %v527 = vand.u32 %v500, 2147483648
    %v528 = vor.u32 1.1754944e-38, %v527
    %v529 = vsel %vm526, %v528, %v524
    %v530 = vmul.f32 1.0, %v529
    %v531 = vtanh.pop %v492
    %v532 = vmul.f32 %v515, %v442
    %534 = vrot.lane.b32.xlu0 %v531, 64
    %v535 = vpop.permute.xlu0 %534
    %v537 = vmul.f32 %v515, %v535
    %539 = vrot.lane.b32.xlu0 %v537, 64
    %v540 = vpop.permute.xlu0 %539
    %v542 = vadd.f32 %v532, %v540
    %v543 = vtanh.pop %v542
    %545 = vrot.lane.b32.xlu0 %v543, 64
    %v546 = vpop.permute.xlu0 %545
    %v548 = vmul.f32 %v530, %v546
    %s549 = smul.u32 3, 2
    %s550 = smul.addr %s549, 8
    %s551 = scalar_lea.vmem [#allocation2], %s550
    %v552 = vld [vmem:[%s551] sm:$0xff]
    %v553 = vld [vmem:[%s551 + $0x8] sm:$0xff]
    %s554 = smul.u32 4, 2
    %s555 = smul.addr %s554, 8
    %s556 = scalar_lea.vmem [#allocation2], %s555
    %v557 = vld [vmem:[%s556] sm:$0xff]
    %v558 = vld [vmem:[%s556 + $0x8] sm:$0xff]
    %v559 = vsel %vm207, %v552, %v557
    %v560 = vsel %vm208, %v553, %v558
    %v561 = vpack.c.bf16 %v548, %v548
    %v563 = vsel %vm261, %v561, 0
    %565 = vmatpush.bf16.msra.mxu0 0
    %566 = vmatpush.bf16.msra.mxu0 0
    %567 = vmatpush.bf16.msra.mxu0 0
    %568 = vmatpush.bf16.msra.mxu0 0
    %569 = vmatpush.bf16.msra.mxu0 %v251
    %570 = vmatpush.bf16.msra.mxu0 %v249
    %571 = vmatpush.bf16.msra.mxu0 %v247
    %572 = vmatpush.bf16.msra.mxu0 %v245
    %573 = vmatmul.bf16.gmra.mxu0 %v563
    %v574 = vpop.f32.mrf.mxu0
    %v575 = vadd.f32 0.0, %v574
    %v576 = vpop.f32.mrf.mxu0
    %577 = vdwg.mxu0
    %578 = vmatpush.bf16.msra.mxu0 0
    %579 = vmatpush.bf16.msra.mxu0 0
    %580 = vmatpush.bf16.msra.mxu0 0
    %581 = vmatpush.bf16.msra.mxu0 0
    %582 = vmatpush.bf16.msra.mxu0 %v252
    %583 = vmatpush.bf16.msra.mxu0 %v250
    %584 = vmatpush.bf16.msra.mxu0 %v248
    %585 = vmatpush.bf16.msra.mxu0 %v246
    %586 = vmatmul.bf16.gmra.mxu0 %v563
    %v587 = vpop.f32.mrf.mxu0
    %v588 = vadd.f32 0.0, %v587
    %v589 = vpop.f32.mrf.mxu0
    %590 = vdwg.mxu0
    %v591 = vadd.f32 %v559, %v575
    %v592 = vadd.f32 %v560, %v588
    %v593 = vxor.u32 %v591, 2147483648
    %v594 = vxor.u32 %v592, 2147483648
    %v595 = vmul.f32 %v593, 1.442695
    %v596 = vpow.pop %v595
    %v597 = vmul.f32 %v594, 1.442695
    %v598 = vpow.pop %v597
    %v599 = vadd.f32 %v596, 1.0
    %v600 = vadd.f32 %v598, 1.0
    %v601 = vrcp.pop %v599
    %v602 = vmul.f32 %v599, %v601
    %v603 = vsub.f32 1.0, %v602
    %v604 = vmul.f32 %v601, %v603
    %v605 = vadd.f32 %v601, %v604
    %vm606 = vweird.f32 %v599
    %vm607 = vweird.f32 %v601
    %vm608 = vmor %vm606, %vm607
    %v609 = vsel %vm608, %v601, %v605
    %v610 = vand.u32 2147483647, %v599
    %vm611 = vcmp.eq.f32.partialorder %v610, 8.507059e+37
    %v612 = vand.u32 %v599, 2147483648
    %v613 = vor.u32 1.1754944e-38, %v612
    %v614 = vsel %vm611, %v613, %v609
    %v615 = vmul.f32 1.0, %v614
    %v616 = vrcp.pop %v600
    %v617 = vmul.f32 %v600, %v616
    %v618 = vsub.f32 1.0, %v617
    %v619 = vmul.f32 %v616, %v618
    %v620 = vadd.f32 %v616, %v619
    %vm621 = vweird.f32 %v600
    %vm622 = vweird.f32 %v616
    %vm623 = vmor %vm621, %vm622
    %v624 = vsel %vm623, %v616, %v620
    %v625 = vand.u32 2147483647, %v600
    %vm626 = vcmp.eq.f32.partialorder %v625, 8.507059e+37
    %v627 = vand.u32 %v600, 2147483648
    %v628 = vor.u32 1.1754944e-38, %v627
    %v629 = vsel %vm626, %v628, %v624
    %v630 = vmul.f32 1.0, %v629
    %v631 = vtanh.pop %v592
    %v632 = vmul.f32 %v615, %v542
    %634 = vrot.lane.b32.xlu0 %v631, 64
    %v635 = vpop.permute.xlu0 %634
    %v637 = vmul.f32 %v615, %v635
    %639 = vrot.lane.b32.xlu0 %v637, 64
    %v640 = vpop.permute.xlu0 %639
    %v642 = vadd.f32 %v632, %v640
    %v643 = vtanh.pop %v642
    %645 = vrot.lane.b32.xlu0 %v643, 64
    %v646 = vpop.permute.xlu0 %645
    %v648 = vmul.f32 %v630, %v646
    %v649 = vsel %vm207, %v557, %v552
    %v650 = vsel %vm208, %v558, %v553
    %v651 = vpack.c.bf16 %v648, %v648
    %v653 = vsel %vm261, %v651, 0
    %655 = vmatpush.bf16.msra.mxu0 0
    %656 = vmatpush.bf16.msra.mxu0 0
    %657 = vmatpush.bf16.msra.mxu0 0
    %658 = vmatpush.bf16.msra.mxu0 0
    %659 = vmatpush.bf16.msra.mxu0 %v251
    %660 = vmatpush.bf16.msra.mxu0 %v249
    %661 = vmatpush.bf16.msra.mxu0 %v247
    %662 = vmatpush.bf16.msra.mxu0 %v245
    %663 = vmatmul.bf16.gmra.mxu0 %v653
    %v664 = vpop.f32.mrf.mxu0
    %v665 = vadd.f32 0.0, %v664
    %v666 = vpop.f32.mrf.mxu0
    %667 = vdwg.mxu0
    %668 = vmatpush.bf16.msra.mxu0 0
    %669 = vmatpush.bf16.msra.mxu0 0
    %670 = vmatpush.bf16.msra.mxu0 0
    %671 = vmatpush.bf16.msra.mxu0 0
    %672 = vmatpush.bf16.msra.mxu0 %v252
    %673 = vmatpush.bf16.msra.mxu0 %v250
    %674 = vmatpush.bf16.msra.mxu0 %v248
    %675 = vmatpush.bf16.msra.mxu0 %v246
    %676 = vmatmul.bf16.gmra.mxu0 %v653
    %v677 = vpop.f32.mrf.mxu0
    %v678 = vadd.f32 0.0, %v677
    %v679 = vpop.f32.mrf.mxu0
    %680 = vdwg.mxu0
    %v681 = vadd.f32 %v649, %v665
    %v682 = vadd.f32 %v650, %v678
    %v683 = vxor.u32 %v681, 2147483648
    %v684 = vxor.u32 %v682, 2147483648
    %v685 = vmul.f32 %v683, 1.442695
    %v686 = vpow.pop %v685
    %v687 = vmul.f32 %v684, 1.442695
    %v688 = vpow.pop %v687
    %v689 = vadd.f32 %v686, 1.0
    %v690 = vadd.f32 %v688, 1.0
    %v691 = vrcp.pop %v689
    %v692 = vmul.f32 %v689, %v691
    %v693 = vsub.f32 1.0, %v692
    %v694 = vmul.f32 %v691, %v693
    %v695 = vadd.f32 %v691, %v694
    %vm696 = vweird.f32 %v689
    %vm697 = vweird.f32 %v691
    %vm698 = vmor %vm696, %vm697
    %v699 = vsel %vm698, %v691, %v695
    %v700 = vand.u32 2147483647, %v689
    %vm701 = vcmp.eq.f32.partialorder %v700, 8.507059e+37
    %v702 = vand.u32 %v689, 2147483648
    %v703 = vor.u32 1.1754944e-38, %v702
    %v704 = vsel %vm701, %v703, %v699
    %v705 = vmul.f32 1.0, %v704
    %v706 = vrcp.pop %v690
    %v707 = vmul.f32 %v690, %v706
    %v708 = vsub.f32 1.0, %v707
    %v709 = vmul.f32 %v706, %v708
    %v710 = vadd.f32 %v706, %v709
    %vm711 = vweird.f32 %v690
    %vm712 = vweird.f32 %v706
    %vm713 = vmor %vm711, %vm712
    %v714 = vsel %vm713, %v706, %v710
    %v715 = vand.u32 2147483647, %v690
    %vm716 = vcmp.eq.f32.partialorder %v715, 8.507059e+37
    %v717 = vand.u32 %v690, 2147483648
    %v718 = vor.u32 1.1754944e-38, %v717
    %v719 = vsel %vm716, %v718, %v714
    %v720 = vmul.f32 1.0, %v719
    %v721 = vtanh.pop %v682
    %v722 = vmul.f32 %v705, %v642
    %724 = vrot.lane.b32.xlu0 %v721, 64
    %v725 = vpop.permute.xlu0 %724
    %v727 = vmul.f32 %v705, %v725
    %729 = vrot.lane.b32.xlu0 %v727, 64
    %v730 = vpop.permute.xlu0 %729
    %v732 = vadd.f32 %v722, %v730
    %v733 = vtanh.pop %v732
    %735 = vrot.lane.b32.xlu0 %v733, 64
    %v736 = vpop.permute.xlu0 %735
    %v738 = vmul.f32 %v720, %v736
    %v739 = vsel %vm207, %v457, %v452
    %v740 = vsel %vm208, %v458, %v453
    %v741 = vpack.c.bf16 %v738, %v738
    %v743 = vsel %vm261, %v741, 0
    %745 = vmatpush.bf16.msra.mxu0 0
    %746 = vmatpush.bf16.msra.mxu0 0
    %747 = vmatpush.bf16.msra.mxu0 0
    %748 = vmatpush.bf16.msra.mxu0 0
    %749 = vmatpush.bf16.msra.mxu0 %v251
    %750 = vmatpush.bf16.msra.mxu0 %v249
    %751 = vmatpush.bf16.msra.mxu0 %v247
    %752 = vmatpush.bf16.msra.mxu0 %v245
    %753 = vmatmul.bf16.gmra.mxu0 %v743
    %v754 = vpop.f32.mrf.mxu0
    %v755 = vadd.f32 0.0, %v754
    %v756 = vpop.f32.mrf.mxu0
    %757 = vdwg.mxu0
    %758 = vmatpush.bf16.msra.mxu0 0
    %759 = vmatpush.bf16.msra.mxu0 0
    %760 = vmatpush.bf16.msra.mxu0 0
    %761 = vmatpush.bf16.msra.mxu0 0
    %762 = vmatpush.bf16.msra.mxu0 %v252
    %763 = vmatpush.bf16.msra.mxu0 %v250
    %764 = vmatpush.bf16.msra.mxu0 %v248
    %765 = vmatpush.bf16.msra.mxu0 %v246
    %766 = vmatmul.bf16.gmra.mxu0 %v743
    %v767 = vpop.f32.mrf.mxu0
    %v768 = vadd.f32 0.0, %v767
    %v769 = vpop.f32.mrf.mxu0
    %770 = vdwg.mxu0
    %v771 = vadd.f32 %v739, %v755
    %v772 = vadd.f32 %v740, %v768
    %v773 = vxor.u32 %v771, 2147483648
    %v774 = vxor.u32 %v772, 2147483648
    %v775 = vmul.f32 %v773, 1.442695
    %v776 = vpow.pop %v775
    %v777 = vmul.f32 %v774, 1.442695
    %v778 = vpow.pop %v777
    %v779 = vadd.f32 %v776, 1.0
    %v780 = vadd.f32 %v778, 1.0
    %v781 = vrcp.pop %v779
    %v782 = vmul.f32 %v779, %v781
    %v783 = vsub.f32 1.0, %v782
    %v784 = vmul.f32 %v781, %v783
    %v785 = vadd.f32 %v781, %v784
    %vm786 = vweird.f32 %v779
    %vm787 = vweird.f32 %v781
    %vm788 = vmor %vm786, %vm787
    %v789 = vsel %vm788, %v781, %v785
    %v790 = vand.u32 2147483647, %v779
    %vm791 = vcmp.eq.f32.partialorder %v790, 8.507059e+37
    %v792 = vand.u32 %v779, 2147483648
    %v793 = vor.u32 1.1754944e-38, %v792
    %v794 = vsel %vm791, %v793, %v789
    %v795 = vmul.f32 1.0, %v794
    %v796 = vrcp.pop %v780
    %v797 = vmul.f32 %v780, %v796
    %v798 = vsub.f32 1.0, %v797
    %v799 = vmul.f32 %v796, %v798
    %v800 = vadd.f32 %v796, %v799
    %vm801 = vweird.f32 %v780
    %vm802 = vweird.f32 %v796
    %vm803 = vmor %vm801, %vm802
    %v804 = vsel %vm803, %v796, %v800
    %v805 = vand.u32 2147483647, %v780
    %vm806 = vcmp.eq.f32.partialorder %v805, 8.507059e+37
    %v807 = vand.u32 %v780, 2147483648
    %v808 = vor.u32 1.1754944e-38, %v807
    %v809 = vsel %vm806, %v808, %v804
    %v810 = vmul.f32 1.0, %v809
    %v811 = vtanh.pop %v772
    %v812 = vmul.f32 %v795, %v732
    %814 = vrot.lane.b32.xlu0 %v811, 64
    %v815 = vpop.permute.xlu0 %814
    %v817 = vmul.f32 %v795, %v815
    %819 = vrot.lane.b32.xlu0 %v817, 64
    %v820 = vpop.permute.xlu0 %819
    %v822 = vadd.f32 %v812, %v820
    %v823 = vtanh.pop %v822
    %825 = vrot.lane.b32.xlu0 %v823, 64
    %v826 = vpop.permute.xlu0 %825
    %v828 = vmul.f32 %v810, %v826
    %v829 = vsel %vm207, %v357, %v352
    %v830 = vsel %vm208, %v358, %v353
    %v831 = vpack.c.bf16 %v828, %v828
    %v833 = vsel %vm261, %v831, 0
    %835 = vmatpush.bf16.msra.mxu0 0
    %836 = vmatpush.bf16.msra.mxu0 0
    %837 = vmatpush.bf16.msra.mxu0 0
    %838 = vmatpush.bf16.msra.mxu0 0
    %839 = vmatpush.bf16.msra.mxu0 %v251
    %840 = vmatpush.bf16.msra.mxu0 %v249
    %841 = vmatpush.bf16.msra.mxu0 %v247
    %842 = vmatpush.bf16.msra.mxu0 %v245
    %843 = vmatmul.bf16.gmra.mxu0 %v833
    %v844 = vpop.f32.mrf.mxu0
    %v845 = vadd.f32 0.0, %v844
    %v846 = vpop.f32.mrf.mxu0
    %847 = vdwg.mxu0
    %848 = vmatpush.bf16.msra.mxu0 0
    %849 = vmatpush.bf16.msra.mxu0 0
    %850 = vmatpush.bf16.msra.mxu0 0
    %851 = vmatpush.bf16.msra.mxu0 0
    %852 = vmatpush.bf16.msra.mxu0 %v252
    %853 = vmatpush.bf16.msra.mxu0 %v250
    %854 = vmatpush.bf16.msra.mxu0 %v248
    %855 = vmatpush.bf16.msra.mxu0 %v246
    %856 = vmatmul.bf16.gmra.mxu0 %v833
    %v857 = vpop.f32.mrf.mxu0
    %v858 = vadd.f32 0.0, %v857
    %v859 = vpop.f32.mrf.mxu0
    %860 = vdwg.mxu0
    %v861 = vadd.f32 %v829, %v845
    %v862 = vadd.f32 %v830, %v858
    %v863 = vxor.u32 %v861, 2147483648
    %v864 = vxor.u32 %v862, 2147483648
    %v865 = vmul.f32 %v863, 1.442695
    %v866 = vpow.pop %v865
    %v867 = vmul.f32 %v864, 1.442695
    %v868 = vpow.pop %v867
    %v869 = vadd.f32 %v866, 1.0
    %v870 = vadd.f32 %v868, 1.0
    %v871 = vrcp.pop %v869
    %v872 = vmul.f32 %v869, %v871
    %v873 = vsub.f32 1.0, %v872
    %v874 = vmul.f32 %v871, %v873
    %v875 = vadd.f32 %v871, %v874
    %vm876 = vweird.f32 %v869
    %vm877 = vweird.f32 %v871
    %vm878 = vmor %vm876, %vm877
    %v879 = vsel %vm878, %v871, %v875
    %v880 = vand.u32 2147483647, %v869
    %vm881 = vcmp.eq.f32.partialorder %v880, 8.507059e+37
    %v882 = vand.u32 %v869, 2147483648
    %v883 = vor.u32 1.1754944e-38, %v882
    %v884 = vsel %vm881, %v883, %v879
    %v885 = vmul.f32 1.0, %v884
    %v886 = vrcp.pop %v870
    %v887 = vmul.f32 %v870, %v886
    %v888 = vsub.f32 1.0, %v887
    %v889 = vmul.f32 %v886, %v888
    %v890 = vadd.f32 %v886, %v889
    %vm891 = vweird.f32 %v870
    %vm892 = vweird.f32 %v886
    %vm893 = vmor %vm891, %vm892
    %v894 = vsel %vm893, %v886, %v890
    %v895 = vand.u32 2147483647, %v870
    %vm896 = vcmp.eq.f32.partialorder %v895, 8.507059e+37
    %v897 = vand.u32 %v870, 2147483648
    %v898 = vor.u32 1.1754944e-38, %v897
    %v899 = vsel %vm896, %v898, %v894
    %v900 = vmul.f32 1.0, %v899
    %v901 = vtanh.pop %v862
    %v902 = vmul.f32 %v885, %v822
    %904 = vrot.lane.b32.xlu0 %v901, 64
    %v905 = vpop.permute.xlu0 %904
    %v907 = vmul.f32 %v885, %v905
    %909 = vrot.lane.b32.xlu0 %v907, 64
    %v910 = vpop.permute.xlu0 %909
    %v912 = vadd.f32 %v902, %v910
    %v913 = vtanh.pop %v912
    %915 = vrot.lane.b32.xlu0 %v913, 64
    %v916 = vpop.permute.xlu0 %915
    %v918 = vmul.f32 %v900, %v916
    %v919 = vsel %vm207, %v217, %v212
    %v920 = vsel %vm208, %v218, %v213
    %v921 = vpack.c.bf16 %v918, %v918
    %v923 = vsel %vm261, %v921, 0
    %925 = vmatpush.bf16.msra.mxu0 0
    %926 = vmatpush.bf16.msra.mxu0 0
    %927 = vmatpush.bf16.msra.mxu0 0
    %928 = vmatpush.bf16.msra.mxu0 0
    %929 = vmatpush.bf16.msra.mxu0 %v251
    %930 = vmatpush.bf16.msra.mxu0 %v249
    %931 = vmatpush.bf16.msra.mxu0 %v247
    %932 = vmatpush.bf16.msra.mxu0 %v245
    %933 = vmatmul.bf16.gmra.mxu0 %v923
    %v934 = vpop.f32.mrf.mxu0
    %v935 = vadd.f32 0.0, %v934
    %v936 = vpop.f32.mrf.mxu0
    %937 = vdwg.mxu0
    %938 = vmatpush.bf16.msra.mxu0 0
    %939 = vmatpush.bf16.msra.mxu0 0
    %940 = vmatpush.bf16.msra.mxu0 0
    %941 = vmatpush.bf16.msra.mxu0 0
    %942 = vmatpush.bf16.msra.mxu0 %v252
    %943 = vmatpush.bf16.msra.mxu0 %v250
    %944 = vmatpush.bf16.msra.mxu0 %v248
    %945 = vmatpush.bf16.msra.mxu0 %v246
    %946 = vmatmul.bf16.gmra.mxu0 %v923
    %v947 = vpop.f32.mrf.mxu0
    %v948 = vadd.f32 0.0, %v947
    %v949 = vpop.f32.mrf.mxu0
    %950 = vdwg.mxu0
    %v951 = vadd.f32 %v919, %v935
    %v952 = vadd.f32 %v920, %v948
    %v953 = vxor.u32 %v951, 2147483648
    %v954 = vxor.u32 %v952, 2147483648
    %v955 = vmul.f32 %v953, 1.442695
    %v956 = vpow.pop %v955
    %v957 = vmul.f32 %v954, 1.442695
    %v958 = vpow.pop %v957
    %v959 = vadd.f32 %v956, 1.0
    %v960 = vadd.f32 %v958, 1.0
    %v961 = vrcp.pop %v959
    %v962 = vmul.f32 %v959, %v961
    %v963 = vsub.f32 1.0, %v962
    %v964 = vmul.f32 %v961, %v963
    %v965 = vadd.f32 %v961, %v964
    %vm966 = vweird.f32 %v959
    %vm967 = vweird.f32 %v961
    %vm968 = vmor %vm966, %vm967
    %v969 = vsel %vm968, %v961, %v965
    %v970 = vand.u32 2147483647, %v959
    %vm971 = vcmp.eq.f32.partialorder %v970, 8.507059e+37
    %v972 = vand.u32 %v959, 2147483648
    %v973 = vor.u32 1.1754944e-38, %v972
    %v974 = vsel %vm971, %v973, %v969
    %v975 = vmul.f32 1.0, %v974
    %v976 = vrcp.pop %v960
    %v977 = vmul.f32 %v960, %v976
    %v978 = vsub.f32 1.0, %v977
    %v979 = vmul.f32 %v976, %v978
    %v980 = vadd.f32 %v976, %v979
    %vm981 = vweird.f32 %v960
    %vm982 = vweird.f32 %v976
    %vm983 = vmor %vm981, %vm982
    %v984 = vsel %vm983, %v976, %v980
    %v985 = vand.u32 2147483647, %v960
    %vm986 = vcmp.eq.f32.partialorder %v985, 8.507059e+37
    %v987 = vand.u32 %v960, 2147483648
    %v988 = vor.u32 1.1754944e-38, %v987
    %v989 = vsel %vm986, %v988, %v984
    %v990 = vmul.f32 1.0, %v989
    %v991 = vtanh.pop %v952
    %v992 = vmul.f32 %v975, %v912
    %994 = vrot.lane.b32.xlu0 %v991, 64
    %v995 = vpop.permute.xlu0 %994
    %v997 = vmul.f32 %v975, %v995
    %999 = vrot.lane.b32.xlu0 %v997, 64
    %v1000 = vpop.permute.xlu0 %999
    %v1002 = vadd.f32 %v992, %v1000
    %v1003 = vtanh.pop %v1002
    %1005 = vrot.lane.b32.xlu0 %v1003, 64
    %v1006 = vpop.permute.xlu0 %1005
    %v1008 = vmul.f32 %v990, %v1006
    %v1009 = vsel %vm261, %v1008, 0.0
    %1010 = vst [vmem:[#allocation6] sm:$0xff] %v1009
    // Predicated region
    $region22: #{tpu_custom_call.1} parent=1 // pred_check
      _
    $region23: #{tpu_custom_call.1} parent=1 // pred_check_branch
      %1012 = sbr.rel (0) target = $region25
    $region24: #{tpu_custom_call.1} parent=1 // pred_region
      %1014 = vsyncadd [#allocation5], 0
      %s1016 = sshll.u32 [#allocation6], 4
      %s1017 = int_to_ptr.vmem [resolvable:$true] %s1016
      %s1018 = sshll.u32 %s4, 4
      %s1019 = int_to_ptr.hbm [resolvable:$true] %s1018
      %1021 = dma.vmem_to_hbm [thread:$0]  %s1017, 128, %s1019, [#allocation5]
    $region25: #{tpu_custom_call.1} parent=1 // pred_fallthru
      _
    // Predicated region
    $region26: #{tpu_custom_call.1} parent=1 // pred_check
      _
    $region27: #{tpu_custom_call.1} parent=1 // pred_check_branch
      %1023 = sbr.rel (0) target = $region29
    $region28: #{tpu_custom_call.1} parent=1 // pred_region
      %1025 = dma.done [#allocation5], 128
    $region29: #{tpu_custom_call.1} parent=1 // pred_fallthru
      _
    %1026 = vsyncpa [#allocation4], 1
    %1027 = vsyncpa [#allocation5], 1

</llo_original>
